<compile_context>
chip_gen: v7x
topology: tpu7x:2x2x1
jax: 0.10.0
libtpu: 0.0.40
codegen_flags: <defaults>
</compile_context>

<pallas_src>
import functools

import jax
import jax.numpy as jnp
from jax import lax
from jax.experimental import pallas as pl
from jax.experimental.pallas import tpu as pltpu


def _contrastive_kernel(xr_ref, xc_ref, rn_ref, cn_ref, lr_ref, lc_ref,
                        *rest, margin, need_mask, single_k):
    # Unpack the variable tail: optional validity vectors, output, scratch.
    if need_mask:
        vr_ref, vc_ref, out_ref, *scratch = rest
    else:
        out_ref, *scratch = rest
    if single_k:
        (acc_row,) = scratch
        acc_d = None
    else:
        acc_d, acc_row = scratch

    j = pl.program_id(1)
    k = pl.program_id(2)
    nj = pl.num_programs(1)
    nk = pl.num_programs(2)

    # Fresh per-row-block loss accumulator at the start of each i block.
    @pl.when((j == 0) & (k == 0))
    def _():
        acc_row[...] = jnp.zeros_like(acc_row)

    # Gram term on the MXU (contract the feature dim of both blocks).
    g = lax.dot_general(xr_ref[...], xc_ref[...], (((1,), (1,)), ((), ())),
                        preferred_element_type=jnp.float32)       # (tb, tb) f32

    if not single_k:
        # Write directly on the first k step (no zero-init + add).
        @pl.when(k == 0)
        def _():
            acc_d[...] = g

        @pl.when(k > 0)
        def _():
            acc_d[...] += g

    # Last feature chunk: fuse the contrastive/hinge combine and accumulate
    # per-row partial sums for this row block.
    @pl.when(k == nk - 1)
    def _():
        gram = g if single_k else acc_d[...]
        # ||xi||^2 + ||xj||^2 - 2<xi,xj>, clamped >= 0 (reference d is >= 0).
        d = jnp.maximum(rn_ref[...] + cn_ref[...] - 2.0 * gram, 0.0)
        same = lr_ref[...] == lc_ref[...]             # (tb,1)==(1,tb) -> (tb,tb)
        loss = jnp.where(same, jnp.maximum(margin - d, 0.0), d)
        if need_mask:
            loss = loss * (vr_ref[...] * vc_ref[...])
        acc_row[...] += jnp.sum(loss, axis=1, keepdims=True)

    @pl.when((j == nj - 1) & (k == nk - 1))
    def _():
        out_ref[...] = acc_row[...]


def contrastive_embedding_loss(x: jax.Array, y: jax.Array, *,
                               margin: float = 1.0,
                               compute_dtype=jnp.bfloat16,
                               max_block_b: int = 256,
                               max_block_k: int = 2048) -> jax.Array:
    """Pallas implementation of ContrastiveEmbeddingLoss (euclidean metric)."""
    x = x.reshape(x.shape[0], -1)
    B, D = x.shape
    xf = x.astype(jnp.float32)
    labels = y.reshape(B).astype(jnp.int32)

    # ---- batch tiling -------------------------------------------------------
    # B <= 128: one full-dim block (no padding).  128 < B <= 512: 128-row tiles
    # so the "parallel" row axis has >= 2 blocks (v7x megacore).  Larger: 256.
    if B <= 128:
        tb = B
    elif B <= 2 * max_block_b:
        tb = 128
    else:
        tb = max_block_b
    b_pad = pl.cdiv(B, tb) * tb

    # ---- feature tiling -----------------------------------------------------
    # Prefer a single k block (no re-streaming of the x row block across j).
    # Otherwise zero-pad D to a multiple of the 128-aligned chunk size
    # (zero features do not change norms or Gram terms).
    if D <= max_block_k:
        tk, d_pad = D, D
    else:
        tk = max_block_k                       # multiple of 128
        d_pad = pl.cdiv(D, tk) * tk
    single_k = (d_pad == tk)

    need_mask = b_pad != B
    if d_pad != D:
        xf = jnp.pad(xf, ((0, 0), (0, d_pad - D)))
    if need_mask:
        xf = jnp.pad(xf, ((0, b_pad - B), (0, 0)))
        labels = jnp.pad(labels, (0, b_pad - B))

    # Squared row norms: computed once (O(B*D)), in f32, outside the grid.
    sq = jnp.sum(xf * xf, axis=1, keepdims=True)          # (b_pad, 1) f32
    row_norms = sq
    col_norms = sq.reshape(1, b_pad)

    # Gram inputs in the (typically bf16) MXU dtype.
    xg = xf.astype(compute_dtype)

    lab_rows = labels.reshape(b_pad, 1)
    lab_cols = labels.reshape(1, b_pad)

    gi = b_pad // tb
    gk = d_pad // tk
    grid = (gi, gi, gk)

    inputs = [xg, xg, row_norms, col_norms, lab_rows, lab_cols]
    in_specs = [
        pl.BlockSpec((tb, tk), lambda i, j, k: (i, k)),    # x as rows
        pl.BlockSpec((tb, tk), lambda i, j, k: (j, k)),    # x as cols
        pl.BlockSpec((tb, 1), lambda i, j, k: (i, 0)),     # row norms
        pl.BlockSpec((1, tb), lambda i, j, k: (0, j)),     # col norms
        pl.BlockSpec((tb, 1), lambda i, j, k: (i, 0)),     # labels (rows)
        pl.BlockSpec((1, tb), lambda i, j, k: (0, j)),     # labels (cols)
    ]
    if need_mask:
        valid = (jnp.arange(b_pad) < B).astype(jnp.float32)
        inputs += [valid.reshape(b_pad, 1), valid.reshape(1, b_pad)]
        in_specs += [
            pl.BlockSpec((tb, 1), lambda i, j, k: (i, 0)),  # row validity
            pl.BlockSpec((1, tb), lambda i, j, k: (0, j)),  # col validity
        ]

    scratch_shapes = []
    if not single_k:
        scratch_shapes.append(pltpu.VMEM((tb, tb), jnp.float32))  # Gram accum
    scratch_shapes.append(pltpu.VMEM((tb, 1), jnp.float32))       # row loss sums

    kernel = functools.partial(
        _contrastive_kernel,
        margin=float(margin), need_mask=need_mask, single_k=single_k)

    row_sums = pl.pallas_call(
        kernel,
        out_shape=jax.ShapeDtypeStruct((b_pad, 1), jnp.float32),
        grid_spec=pltpu.PrefetchScalarGridSpec(
            num_scalar_prefetch=0,
            grid=grid,
            in_specs=in_specs,
            out_specs=pl.BlockSpec((tb, 1), lambda i, j, k: (i, 0)),
            scratch_shapes=scratch_shapes,
        ),
        compiler_params=pltpu.CompilerParams(
            dimension_semantics=("parallel", "arbitrary", "arbitrary"),
            vmem_limit_bytes=32 * 1024 * 1024,
        ),
    )(*inputs)

    # Mean over the full B x B pair matrix (padded rows/cols contribute zero).
    return jnp.sum(row_sums) / (jnp.float32(B) * jnp.float32(B))


def contrastive_embedding_loss_ref(x: jax.Array, y: jax.Array,
                                   margin: float = 1.0) -> jax.Array:
    """Pure-JAX reference mirroring the PyTorch forward (euclidean metric)."""
    x = x.reshape(x.shape[0], -1).astype(jnp.float32)
    d = jnp.sum((x[None, :, :] - x[:, None, :]) ** 2, axis=-1)
    same = (y[:, None] == y[None, :]).astype(jnp.float32)
    return jnp.mean((1.0 - same) * d + same * jnp.maximum(margin - d, 0.0))


if __name__ == "__main__":
    key = jax.random.PRNGKey(0)
    kx, ky = jax.random.split(key)
    batch, hidden = 8, 32
    x = jax.random.normal(kx, (batch, hidden), dtype=jnp.float32)   # embeddings
    y = jax.random.randint(ky, (batch,), 0, 3, dtype=jnp.int32)     # class labels

    ref = contrastive_embedding_loss_ref(x, y, margin=1.0)

    # Exact-precision path (f32 Gram): tight check against the reference.
    out_f32 = contrastive_embedding_loss(x, y, margin=1.0,
                                         compute_dtype=jnp.float32)
    jax.block_until_ready(out_f32)
    assert out_f32.shape == ()
    assert jnp.allclose(out_f32, ref, rtol=1e-4, atol=1e-4), (out_f32, ref)

    # Default fast path (bf16 Gram on the MXU, f32 norms / accumulation).
    out_bf16 = contrastive_embedding_loss(x, y, margin=1.0)
    jax.block_until_ready(out_bf16)
    assert jnp.allclose(out_bf16, ref, rtol=2e-2, atol=2e-2), (out_bf16, ref)

    # Multi-block + padding path (row tiling, validity masking), still small.
    batch2 = 200
    kx2, ky2 = jax.random.split(jax.random.PRNGKey(1))
    x2 = jax.random.normal(kx2, (batch2, hidden), dtype=jnp.float32)
    y2 = jax.random.randint(ky2, (batch2,), 0, 5, dtype=jnp.int32)
    out2 = contrastive_embedding_loss(x2, y2, margin=1.0,
                                      compute_dtype=jnp.float32)
    jax.block_until_ready(out2)
    ref2 = contrastive_embedding_loss_ref(x2, y2, margin=1.0)
    assert jnp.allclose(out2, ref2, rtol=1e-4, atol=1e-4), (out2, ref2)

    print("KERNEL_OK")
</pallas_src>

<mosaic_0001>
module attributes {stable_mosaic.version = 11 : i64} {
  func.func @_contrastive_kernel(%arg0: i32, %arg1: i32, %arg2: i32, %arg3: memref<8x32xf32, #tpu.memory_space<vmem>>, %arg4: memref<8x32xf32, #tpu.memory_space<vmem>>, %arg5: memref<8x1xf32, #tpu.memory_space<vmem>>, %arg6: memref<1x8xf32, #tpu.memory_space<vmem>>, %arg7: memref<8x1xi32, #tpu.memory_space<vmem>>, %arg8: memref<1x8xi32, #tpu.memory_space<vmem>>, %arg9: memref<8x1xf32, #tpu.memory_space<vmem>>, %arg10: memref<8x1xf32, #tpu.memory_space<vmem>>) attributes {dimension_semantics = [#tpu.dimension_semantics<parallel>, #tpu.dimension_semantics<arbitrary>, #tpu.dimension_semantics<arbitrary>], iteration_bounds = array<i64: 1, 1, 1>, scalar_prefetch = 0 : i64, scratch_operands = 1 : i64, tpu.core_type = #tpu.core_type<tc>, window_params = [{transform_indices = @transform_0, window_bounds = array<i64: 8, 32>}, {transform_indices = @transform_1, window_bounds = array<i64: 8, 32>}, {transform_indices = @transform_2, window_bounds = array<i64: 8, 1>}, {transform_indices = @transform_3, window_bounds = array<i64: 1, 8>}, {transform_indices = @transform_4, window_bounds = array<i64: 8, 1>}, {transform_indices = @transform_5, window_bounds = array<i64: 1, 8>}, {transform_indices = @transform_6, window_bounds = array<i64: 8, 1>}]} {
    %c0_i32 = arith.constant 0 : i32
    %0 = arith.cmpi eq, %arg1, %c0_i32 : i32
    %c0_i32_0 = arith.constant 0 : i32
    %1 = arith.cmpi eq, %arg2, %c0_i32_0 : i32
    %2 = arith.andi %0, %1 : i1
    %3 = arith.extui %2 : i1 to i32
    %c0_i32_1 = arith.constant 0 : i32
    %4 = arith.cmpi ne, %3, %c0_i32_1 : i32
    scf.if %4 {
      %cst_10 = arith.constant 0.000000e+00 : f32
      %16 = vector.broadcast %cst_10 : f32 to vector<8x1xf32>
      %c0_11 = arith.constant 0 : index
      %c0_12 = arith.constant 0 : index
      %17 = vector.load %arg10[%c0_11, %c0_12] : memref<8x1xf32, #tpu.memory_space<vmem>>, vector<8x1xf32>
      tpu.vector_store %arg10[%c0_11, %c0_12], %16 {strides = array<i32>} : memref<8x1xf32, #tpu.memory_space<vmem>>, vector<8x1xf32>,
    } else {
    }
    %c0 = arith.constant 0 : index
    %c0_2 = arith.constant 0 : index
    %5 = vector.load %arg3[%c0, %c0_2] : memref<8x32xf32, #tpu.memory_space<vmem>>, vector<8x32xf32>
    %c0_3 = arith.constant 0 : index
    %c0_4 = arith.constant 0 : index
    %6 = vector.load %arg4[%c0_3, %c0_4] : memref<8x32xf32, #tpu.memory_space<vmem>>, vector<8x32xf32>
    %cst = arith.constant dense<0.000000e+00> : vector<8x8xf32>
    %7 = tpu.matmul %5, %6, %cst {dimension_numbers = #tpu.dot_dimension_numbers<[1], [1], [0], [0], [0, 0, 1, 0], [], []>} : vector<8x32xf32>, vector<8x32xf32>, vector<8x8xf32> -> vector<8x8xf32>
    %c0_i32_5 = arith.constant 0 : i32
    %8 = arith.cmpi eq, %arg2, %c0_i32_5 : i32
    %9 = arith.extui %8 : i1 to i32
    %c0_i32_6 = arith.constant 0 : i32
    %10 = arith.cmpi ne, %9, %c0_i32_6 : i32
    scf.if %10 {
      %c0_10 = arith.constant 0 : index
      %c0_11 = arith.constant 0 : index
      %16 = vector.load %arg5[%c0_10, %c0_11] : memref<8x1xf32, #tpu.memory_space<vmem>>, vector<8x1xf32>
      %c0_12 = arith.constant 0 : index
      %c0_13 = arith.constant 0 : index
      %17 = vector.load %arg6[%c0_12, %c0_13] : memref<1x8xf32, #tpu.memory_space<vmem>>, vector<1x8xf32>
      %18 = vector.broadcast %16 : vector<8x1xf32> to vector<8x8xf32>
      %19 = vector.broadcast %17 : vector<1x8xf32> to vector<8x8xf32>
      %20 = arith.addf %18, %19 : vector<8x8xf32>
      %cst_14 = arith.constant 2.000000e+00 : f32
      %21 = vector.broadcast %cst_14 : f32 to vector<8x8xf32>
      %22 = arith.mulf %21, %7 : vector<8x8xf32>
      %23 = arith.subf %20, %22 : vector<8x8xf32>
      %cst_15 = arith.constant 0.000000e+00 : f32
      %24 = vector.broadcast %cst_15 : f32 to vector<8x8xf32>
      %25 = arith.maximumf %23, %24 : vector<8x8xf32>
      %c0_16 = arith.constant 0 : index
      %c0_17 = arith.constant 0 : index
      %26 = vector.load %arg7[%c0_16, %c0_17] : memref<8x1xi32, #tpu.memory_space<vmem>>, vector<8x1xi32>
      %c0_18 = arith.constant 0 : index
      %c0_19 = arith.constant 0 : index
      %27 = vector.load %arg8[%c0_18, %c0_19] : memref<1x8xi32, #tpu.memory_space<vmem>>, vector<1x8xi32>
      %28 = vector.broadcast %26 : vector<8x1xi32> to vector<8x8xi32>
      %29 = vector.broadcast %27 : vector<1x8xi32> to vector<8x8xi32>
      %30 = arith.cmpi eq, %28, %29 : vector<8x8xi32>
      %cst_20 = arith.constant 1.000000e+00 : f32
      %31 = vector.broadcast %cst_20 : f32 to vector<8x8xf32>
      %32 = arith.subf %31, %25 : vector<8x8xf32>
      %cst_21 = arith.constant 0.000000e+00 : f32
      %33 = vector.broadcast %cst_21 : f32 to vector<8x8xf32>
      %34 = arith.maximumf %32, %33 : vector<8x8xf32>
      %35 = arith.select %30, %34, %25 : vector<8x8xi1>, vector<8x8xf32>
      %c0_22 = arith.constant 0 : index
      %c0_23 = arith.constant 0 : index
      %36 = vector.load %arg10[%c0_22, %c0_23] : memref<8x1xf32, #tpu.memory_space<vmem>>, vector<8x1xf32>
      %cst_24 = arith.constant dense<0.000000e+00> : vector<8xf32>
      %37 = vector.multi_reduction <add>, %35, %cst_24 [1] : vector<8x8xf32> to vector<8xf32>
      %38 = vector.shape_cast %37 : vector<8xf32> to vector<8x1xf32>
      %39 = arith.addf %36, %38 : vector<8x1xf32>
      %c0_25 = arith.constant 0 : index
      %c0_26 = arith.constant 0 : index
      %40 = vector.load %arg10[%c0_25, %c0_26] : memref<8x1xf32, #tpu.memory_space<vmem>>, vector<8x1xf32>
      tpu.vector_store %arg10[%c0_25, %c0_26], %39 {strides = array<i32>} : memref<8x1xf32, #tpu.memory_space<vmem>>, vector<8x1xf32>,
    } else {
    }
    %c0_i32_7 = arith.constant 0 : i32
    %11 = arith.cmpi eq, %arg1, %c0_i32_7 : i32
    %c0_i32_8 = arith.constant 0 : i32
    %12 = arith.cmpi eq, %arg2, %c0_i32_8 : i32
    %13 = arith.andi %11, %12 : i1
    %14 = arith.extui %13 : i1 to i32
    %c0_i32_9 = arith.constant 0 : i32
    %15 = arith.cmpi ne, %14, %c0_i32_9 : i32
    scf.if %15 {
      %c0_10 = arith.constant 0 : index
      %c0_11 = arith.constant 0 : index
      %16 = vector.load %arg10[%c0_10, %c0_11] : memref<8x1xf32, #tpu.memory_space<vmem>>, vector<8x1xf32>
      %c0_12 = arith.constant 0 : index
      %c0_13 = arith.constant 0 : index
      %17 = vector.load %arg9[%c0_12, %c0_13] : memref<8x1xf32, #tpu.memory_space<vmem>>, vector<8x1xf32>
      tpu.vector_store %arg9[%c0_12, %c0_13], %16 {strides = array<i32>} : memref<8x1xf32, #tpu.memory_space<vmem>>, vector<8x1xf32>,
    } else {
    }
    return
  }
  func.func @transform_0(%arg0: i32, %arg1: i32, %arg2: i32) -> (i32, i32) {
    %c0_i32 = arith.constant 0 : i32
    return %arg0, %arg2 : i32, i32
  }
  func.func @transform_1(%arg0: i32, %arg1: i32, %arg2: i32) -> (i32, i32) {
    %c0_i32 = arith.constant 0 : i32
    return %arg1, %arg2 : i32, i32
  }
  func.func @transform_2(%arg0: i32, %arg1: i32, %arg2: i32) -> (i32, i32) {
    %c0_i32 = arith.constant 0 : i32
    %c0_i32_0 = arith.constant 0 : i32
    return %arg0, %c0_i32 : i32, i32
  }
  func.func @transform_3(%arg0: i32, %arg1: i32, %arg2: i32) -> (i32, i32) {
    %c0_i32 = arith.constant 0 : i32
    %c0_i32_0 = arith.constant 0 : i32
    return %c0_i32, %arg1 : i32, i32
  }
  func.func @transform_4(%arg0: i32, %arg1: i32, %arg2: i32) -> (i32, i32) {
    %c0_i32 = arith.constant 0 : i32
    %c0_i32_0 = arith.constant 0 : i32
    return %arg0, %c0_i32 : i32, i32
  }
  func.func @transform_5(%arg0: i32, %arg1: i32, %arg2: i32) -> (i32, i32) {
    %c0_i32 = arith.constant 0 : i32
    %c0_i32_0 = arith.constant 0 : i32
    return %c0_i32, %arg1 : i32, i32
  }
  func.func @transform_6(%arg0: i32, %arg1: i32, %arg2: i32) -> (i32, i32) {
    %c0_i32 = arith.constant 0 : i32
    %c0_i32_0 = arith.constant 0 : i32
    return %arg0, %c0_i32 : i32, i32
  }
}

</mosaic_0001>

<llo_original>
// kernel: tpu_custom_call.1
$region0: #{tpu_custom_call.1}
  #allocation0 [shape = 'u32[]', space=smem, size = 0x4, offset = 0x4, fixed_abs, tag = 'smem constant byte address 0x4 - core index']
  #allocation1 [shape = 'u32[144,128]{1,0:T(1,128)}', space=vmem, size = 0x12000, scoped, tag = 'internal scratch']
  #allocation2 [shape = 'f32[8,1]{1,0:T(8,128)}', space=vmem, size = 0x1000, scoped, tag = 'scratch operand']
  %s0 = inlined_call_operand.vmem [shape: f32[8,32], index: 0, kind: input, shape index: {}]
  %s1 = inlined_call_operand.vmem [shape: f32[8,32], index: 1, kind: input, shape index: {}]
  %s2 = inlined_call_operand.vmem [shape: f32[8,1], index: 2, kind: input, shape index: {}]
  %s3 = inlined_call_operand.vmem [shape: f32[1,8], index: 3, kind: input, shape index: {}]
  %s4 = inlined_call_operand.vmem [shape: s32[8,1], index: 4, kind: input, shape index: {}]
  %s5 = inlined_call_operand.vmem [shape: s32[1,8], index: 5, kind: input, shape index: {}]
  %s6 = inlined_call_operand.vmem [shape: f32[8,1], index: 6, kind: output, shape index: {}]
  %s7 = sld [smem:[#allocation0]]
  $region46: #{tpu_custom_call.1} parent=0
    _
  %s9 = ssub.s32 1, %s7
  %s10 = scalar_select 0, %s9, %s7
  // Predicated region
  $region2: #{tpu_custom_call.1} parent=0 // pred_check
    _
  $region3: #{tpu_custom_call.1} parent=0 // pred_check_branch
    %12 = sbr.rel (0) target = $region5
  $region4: #{tpu_custom_call.1} parent=0 // pred_region
    _
  $region5: #{tpu_custom_call.1} parent=0 // pred_fallthru
    _
  // Predicated region
  $region6: #{tpu_custom_call.1} parent=0 // pred_check
    _
  $region7: #{tpu_custom_call.1} parent=0 // pred_check_branch
    %14 = sbr.rel (0) target = $region9
  $region8: #{tpu_custom_call.1} parent=0 // pred_region
    _
  $region9: #{tpu_custom_call.1} parent=0 // pred_fallthru
    _
  // Predicated region
  $region10: #{tpu_custom_call.1} parent=0 // pred_check
    _
  $region11: #{tpu_custom_call.1} parent=0 // pred_check_branch
    %16 = sbr.rel (0) target = $region13
  $region12: #{tpu_custom_call.1} parent=0 // pred_region
    _
  $region13: #{tpu_custom_call.1} parent=0 // pred_fallthru
    _
  // Predicated region
  $region14: #{tpu_custom_call.1} parent=0 // pred_check
    _
  $region15: #{tpu_custom_call.1} parent=0 // pred_check_branch
    %18 = sbr.rel (0) target = $region17
  $region16: #{tpu_custom_call.1} parent=0 // pred_region
    _
  $region17: #{tpu_custom_call.1} parent=0 // pred_fallthru
    _
  // Predicated region
  $region18: #{tpu_custom_call.1} parent=0 // pred_check
    _
  $region19: #{tpu_custom_call.1} parent=0 // pred_check_branch
    %20 = sbr.rel (0) target = $region21
  $region20: #{tpu_custom_call.1} parent=0 // pred_region
    _
  $region21: #{tpu_custom_call.1} parent=0 // pred_fallthru
    _
  // Predicated region
  $region22: #{tpu_custom_call.1} parent=0 // pred_check
    _
  $region23: #{tpu_custom_call.1} parent=0 // pred_check_branch
    %22 = sbr.rel (0) target = $region25
  $region24: #{tpu_custom_call.1} parent=0 // pred_region
    _
  $region25: #{tpu_custom_call.1} parent=0 // pred_fallthru
    _
  %p23 = scmp.eq.s32.totalorder 0, 0
  %p24 = scmp.eq.s32.totalorder 0, 0
  %p25 = pnand %p23, %p24
  %p26 = pneg %p25
  // Predicated region
  $region26: #{tpu_custom_call.1} parent=0 // pred_check
    _
  $region27: #{tpu_custom_call.1} parent=0 // pred_check_branch
    %28 = sbr.rel (%p25) target = $region29
  $region28: #{tpu_custom_call.1} parent=0 // pred_region
    %vm29 = vcmask 7168
    %30 = vst.msk [vmem:[#allocation2] sm:$0xff] %vm29, 0.0
  $region29: #{tpu_custom_call.1} parent=0 // pred_fallthru
    _
  %v31 = vld [vmem:[%s0] sm:$0xff]
  %v32 = vld [vmem:[%s1] sm:$0xff]
  %vm33 = vcmask 261120
  %v35 = vsel %vm33, %v31, 0
  %v38 = vsel %vm33, %v32, 0
  %40 = vmatprep.subr.mxu0 0.0
  %41 = vmatpush1.xpose.msra.mxu0 %v38
  %42 = vmatprep.subr.mxu0 0.0
  %43 = vmatpush1.xpose.msra.mxu0 0.0
  %44 = vmatprep.subr.mxu0 0.0
  %45 = vmatpush1.xpose.msra.mxu0 0.0
  %46 = vmatprep.subr.mxu0 0.0
  %47 = vmatpush1.xpose.msra.mxu0 0.0
  %48 = vmatprep.subr.mxu0 0.0
  %49 = vmatpush1.xpose.msra.mxu0 0.0
  %50 = vmatprep.subr.mxu0 0.0
  %51 = vmatpush1.xpose.msra.mxu0 0.0
  %52 = vmatprep.subr.mxu0 0.0
  %53 = vmatpush1.xpose.msra.mxu0 0.0
  %54 = vmatprep.subr.mxu0 0.0
  %55 = vmatpush1.xpose.msra.mxu0 0.0
  %56 = vmatprep.subr.mxu0 0.0
  %57 = vmatpush1.xpose.msra.mxu0 0.0
  %58 = vmatprep.subr.mxu0 0.0
  %59 = vmatpush1.xpose.msra.mxu0 0.0
  %60 = vmatprep.subr.mxu0 0.0
  %61 = vmatpush1.xpose.msra.mxu0 0.0
  %62 = vmatprep.subr.mxu0 0.0
  %63 = vmatpush1.xpose.msra.mxu0 0.0
  %64 = vmatprep.subr.mxu0 0.0
  %65 = vmatpush1.xpose.msra.mxu0 0.0
  %66 = vmatprep.subr.mxu0 0.0
  %67 = vmatpush1.xpose.msra.mxu0 0.0
  %68 = vmatprep.subr.mxu0 0.0
  %69 = vmatpush1.xpose.msra.mxu0 0.0
  %70 = vmatprep.subr.mxu0 0.0
  %71 = vmatpush1.xpose.msra.mxu0 0.0
  %72 = vmatprep.subr.mxu0 0.0
  %73 = vmatpush1.xpose.msra.mxu0 0.0
  %74 = vmatprep.subr.mxu0 0.0
  %75 = vmatpush1.xpose.msra.mxu0 0.0
  %76 = vmatprep.subr.mxu0 0.0
  %77 = vmatpush1.xpose.msra.mxu0 0.0
  %78 = vmatprep.subr.mxu0 0.0
  %79 = vmatpush1.xpose.msra.mxu0 0.0
  %80 = vmatprep.subr.mxu0 0.0
  %81 = vmatpush1.xpose.msra.mxu0 0.0
  %82 = vmatprep.subr.mxu0 0.0
  %83 = vmatpush1.xpose.msra.mxu0 0.0
  %84 = vmatprep.subr.mxu0 0.0
  %85 = vmatpush1.xpose.msra.mxu0 0.0
  %86 = vmatprep.subr.mxu0 0.0
  %87 = vmatpush1.xpose.msra.mxu0 0.0
  %88 = vmatprep.subr.mxu0 0.0
  %89 = vmatpush1.xpose.msra.mxu0 0.0
  %90 = vmatprep.subr.mxu0 0.0
  %91 = vmatpush1.xpose.msra.mxu0 0.0
  %92 = vmatprep.subr.mxu0 0.0
  %93 = vmatpush1.xpose.msra.mxu0 0.0
  %94 = vmatprep.subr.mxu0 0.0
  %95 = vmatpush1.xpose.msra.mxu0 0.0
  %96 = vmatprep.subr.mxu0 0.0
  %97 = vmatpush1.xpose.msra.mxu0 0.0
  %98 = vmatprep.subr.mxu0 0.0
  %99 = vmatpush1.xpose.msra.mxu0 0.0
  %100 = vmatprep.subr.mxu0 0.0
  %101 = vmatpush1.xpose.msra.mxu0 0.0
  %102 = vmatprep.subr.mxu0 0.0
  %103 = vmatpush1.xpose.msra.mxu0 0.0
  %104 = vmatprep.mubr.f32.mxu0 0.0
  %105 = vmatmul.mubr.f32.gmra.mrb[0].mxu0 %v35
  %v106 = vpop.f32.mrb[0].mxu0
  %v107 = vadd.f32 0.0, %v106
  %v108 = vpop.f32.mrb[0].mxu0
  %109 = vdwg.mxu0
  // Predicated region
  $region30: #{tpu_custom_call.1} parent=0 // pred_check
    %p110 = pneg %p24
  $region31: #{tpu_custom_call.1} parent=0 // pred_check_branch
    %112 = sbr.rel (%p110) target = $region33
  $region32: #{tpu_custom_call.1} parent=0 // pred_region
    %v113 = vld [vmem:[%s2] sm:$0xff]
    %v114 = vld [vmem:[%s3] sm:$0x1]
    %116 = vset.pattern.permute.xlu0 0
    %117 = vperm.xlu0 %116, %v113
    %v118 = vpop.permute.xlu0 %117
    %v121 = vlaneseq
    %v122 = vshrl.u32 %v121, 7
    %v123 = vsub.s32 0, %v122
    %v124 = vrot.slane %v114, %v123
    %v126 = vadd.f32 %v118, %v124
    %v127 = vmul.f32 %v107, 2.0
    %v128 = vsub.f32 %v126, %v127
    %v129 = vmax.f32 %v128, 0.0
    %v130 = vld [vmem:[%s4] sm:$0xff]
    %v131 = vld [vmem:[%s5] sm:$0x1]
    %132 = vset.pattern.permute.xlu0 0
    %133 = vperm.xlu0 %132, %v130
    %v134 = vpop.permute.xlu0 %133
    %v135 = vlaneseq
    %v136 = vshrl.u32 %v135, 7
    %v137 = vsub.s32 0, %v136
    %v138 = vrot.slane %v131, %v137
    %vm139 = vcmp.eq.s32.totalorder %v134, %v138
    %v140 = vsub.f32 1.0, %v129
    %v141 = vmax.f32 %v140, 0.0
    %v142 = vsel %vm139, %v141, %v129
    %v143 = vld [vmem:[#allocation2] sm:$0xff]
    %vm144 = vcmask 64512
    %v145 = vsel %vm144, %v142, 0.0
    %146 = vadd.xlane.f32.xlu0 %v145
    %v147 = vpop.xlane.xlu0 %146
    %v148 = vadd.f32 %v143, %v147
    %vm149 = vcmask 7168
    %150 = vst.msk [vmem:[#allocation2] sm:$0xff] %vm149, %v148
  $region33: #{tpu_custom_call.1} parent=0 // pred_fallthru
    _
  // Predicated region
  $region34: #{tpu_custom_call.1} parent=0 // pred_check
    _
  $region35: #{tpu_custom_call.1} parent=0 // pred_check_branch
    %152 = sbr.rel (%p25) target = $region37
  $region36: #{tpu_custom_call.1} parent=0 // pred_region
    %v153 = vld [vmem:[#allocation2] sm:$0xff]
    %vm154 = vcmask 7168
    %155 = vst.msk [vmem:[%s6] sm:$0xff] %vm154, %v153
  $region37: #{tpu_custom_call.1} parent=0 // pred_fallthru
    _
  // Predicated region
  $region38: #{tpu_custom_call.1} parent=0 // pred_check
    _
  $region39: #{tpu_custom_call.1} parent=0 // pred_check_branch
    %157 = sbr.rel (0) target = $region41
  $region40: #{tpu_custom_call.1} parent=0 // pred_region
    _
  $region41: #{tpu_custom_call.1} parent=0 // pred_fallthru
    _
  // Predicated region
  $region42: #{tpu_custom_call.1} parent=0 // pred_check
    _
  $region43: #{tpu_custom_call.1} parent=0 // pred_check_branch
    %159 = sbr.rel (0) target = $region45
  $region44: #{tpu_custom_call.1} parent=0 // pred_region
    _
  $region45: #{tpu_custom_call.1} parent=0 // pred_fallthru
    _

</llo_original>
